<compile_context>
chip_gen: v6e
topology: v6e:2x2x1
jax: 0.10.0
libtpu: 0.0.40
codegen_flags: <defaults>
</compile_context>

<pallas_src>
import jax
import jax.numpy as jnp
from jax.experimental import pallas as pl
from jax.experimental.pallas import tpu as pltpu


def _round_up(x, m):
    return ((x + m - 1) // m) * m


def _patch_proj_kernel(x_ref, w_ref, b_ref, o_ref):
    # x_ref: (TM, K)  w_ref: (K, Ep)  b_ref: (1, Ep)  o_ref: (TM, Ep)
    acc = jnp.dot(x_ref[...], w_ref[...], preferred_element_type=jnp.float32)
    o_ref[...] = (acc + b_ref[...].astype(jnp.float32)).astype(o_ref.dtype)


def patch_proj_matmul(patches, w_pad, bias_pad, *, tm=2048):
    """patches: (M, K), w_pad: (K, Ep), bias_pad: (1, Ep) -> (M, Ep).

    Ep must be a multiple of 128 (lane-dense output stores).  M is tiled with
    TM rows per grid step (pipelined); weight/bias are VMEM-resident.
    """
    M, K = patches.shape
    Kw, Ep = w_pad.shape
    assert Kw == K and Ep % 128 == 0
    tm = max(8, min(tm, _round_up(M, 8)))
    grid = (pl.cdiv(M, tm),)

    cost = pl.CostEstimate(
        flops=2 * M * K * Ep,
        transcendentals=0,
        bytes_accessed=(M * K + K * Ep + Ep + M * Ep) * patches.dtype.itemsize,
    )

    return pl.pallas_call(
        _patch_proj_kernel,
        out_shape=jax.ShapeDtypeStruct((M, Ep), patches.dtype),
        grid=grid,
        in_specs=[
            pl.BlockSpec((tm, K), lambda i: (i, 0)),   # activations: tiled over M
            pl.BlockSpec((K, Ep), lambda i: (0, 0)),   # weight: VMEM-resident
            pl.BlockSpec((1, Ep), lambda i: (0, 0)),   # bias: VMEM-resident
        ],
        out_specs=pl.BlockSpec((tm, Ep), lambda i: (i, 0)),
        compiler_params=pltpu.CompilerParams(
            dimension_semantics=("parallel",)),
        cost_estimate=cost,
    )(patches, w_pad, bias_pad)


class PatchEmbedPallas:
    """JAX/Pallas patch embedding (Conv2d with stride == kernel == patch_size).

    Input layout matches the PyTorch module wrapper: x is (N, L, C) with
    L = H*W (row-major over H then W); output is (N, Hp*Wp, embed_dim).
    """

    def __init__(self, patch_size=4, in_chans=3, embed_dim=96, *, tm=2048, key=None):
        self.patch_size = (patch_size, patch_size) if isinstance(patch_size, int) else tuple(patch_size)
        self.in_chans = in_chans
        self.embed_dim = embed_dim
        self.tm = tm
        ph, pw = self.patch_size
        if key is None:
            key = jax.random.PRNGKey(42)
        kw, kb = jax.random.split(key)

        # PyTorch Conv2d weight layout: (embed_dim, in_chans, ph, pw)
        fan_in = in_chans * ph * pw
        bound = 1.0 / (fan_in ** 0.5)
        self.conv_weight = jax.random.uniform(
            kw, (embed_dim, in_chans, ph, pw), jnp.float32, -bound, bound)
        self.conv_bias = jax.random.uniform(
            kb, (embed_dim,), jnp.float32, -bound, bound)

        # One-time weight rearrangement:
        #  - K flatten order (ph, pw, C) matches the activation patch flatten,
        #    so the per-call activation permute moves contiguous pw*C chunks.
        #  - Pad E to a multiple of 128 so kernel output stores are lane-dense.
        E_pad = _round_up(embed_dim, 128)
        self.embed_dim_padded = E_pad
        w_mat = jnp.transpose(self.conv_weight, (2, 3, 1, 0)).reshape(fan_in, embed_dim)
        self.w_pad = jnp.pad(w_mat, ((0, 0), (0, E_pad - embed_dim)))
        self.bias_pad = jnp.pad(self.conv_bias, (0, E_pad - embed_dim)).reshape(1, E_pad)

    def __call__(self, x, H, W):
        N, L, C = x.shape
        assert L == H * W
        assert C == self.in_chans
        ph, pw = self.patch_size
        Hp, Wp = H // ph, W // pw
        M = N * Hp * Wp
        K = ph * pw * C

        # ---- glue: extract non-overlapping patches, flatten order (ph, pw, C).
        # (N, H*W, C) -> (N, Hp, ph, Wp, pw, C) is a free reshape; the only data
        # movement is the ph<->Wp swap, which moves contiguous pw*C granules.
        # TODO(synk): fully fusing this extraction into the kernel (BlockSpec over
        # (n, hp) slabs + in-VMEM rearrange) is possible but the pw*C-wide lane
        # blocks DMA poorly; kept as a cheap wrapper-side copy per review option (a).
        xr = x.reshape(N, Hp, ph, Wp, pw, C)
        xr = jnp.transpose(xr, (0, 1, 3, 2, 4, 5))      # (N, Hp, Wp, ph, pw, C)
        patches = xr.reshape(M, K)

        # ---- hot path in Pallas: tiled, pipelined matmul + bias (lane-dense out)
        out_pad = patch_proj_matmul(patches, self.w_pad, self.bias_pad, tm=self.tm)

        out = out_pad[:, : self.embed_dim].reshape(N, Hp * Wp, self.embed_dim)
        return out, (Hp, Wp)


def _reference(x, H, W, module: PatchEmbedPallas):
    """Pure-JAX reference reproducing the PyTorch forward (NCHW conv)."""
    N, L, C = x.shape
    ph, pw = module.patch_size
    x_nchw = jnp.transpose(x, (0, 2, 1)).reshape(N, C, H, W)
    y = jax.lax.conv_general_dilated(
        x_nchw, module.conv_weight,
        window_strides=(ph, pw), padding="VALID",
        dimension_numbers=("NCHW", "OIHW", "NCHW"))
    y = y + module.conv_bias.reshape(1, -1, 1, 1)
    N_, E, Hp, Wp = y.shape
    y = y.reshape(N_, E, Hp * Wp).transpose(0, 2, 1)
    return y, (Hp, Wp)


if __name__ == "__main__":
    key = jax.random.PRNGKey(0)
    k_x, k_params = jax.random.split(key)

    # Small shapes consistent with the module's forward.
    N, C, H, W = 2, 4, 16, 16
    patch_size, embed_dim = 4, 32

    x = jax.random.normal(k_x, (N, H * W, C), jnp.float32)

    module = PatchEmbedPallas(patch_size=patch_size, in_chans=C,
                              embed_dim=embed_dim, key=k_params)

    out, (Hp, Wp) = module(x, H, W)
    out = jax.block_until_ready(out)

    # sanity check vs pure-JAX conv reference
    ref, (Hr, Wr) = _reference(x, H, W, module)
    assert out.shape == (N, (H // patch_size) * (W // patch_size), embed_dim)
    assert (Hp, Wp) == (Hr, Wr) == (H // patch_size, W // patch_size)
    assert jnp.allclose(out, ref, atol=1e-4, rtol=1e-4)

    print("KERNEL_OK")
</pallas_src>

<mosaic_0001>
module attributes {stable_mosaic.version = 11 : i64} {
  func.func @_patch_proj_kernel(%arg0: i32, %arg1: memref<32x64xf32, #tpu.memory_space<vmem>>, %arg2: memref<64x128xf32, #tpu.memory_space<vmem>>, %arg3: memref<1x128xf32, #tpu.memory_space<vmem>>, %arg4: memref<32x128xf32, #tpu.memory_space<vmem>>) attributes {dimension_semantics = [#tpu.dimension_semantics<parallel>], iteration_bounds = array<i64: 1>, scalar_prefetch = 0 : i64, scratch_operands = 0 : i64, tpu.core_type = #tpu.core_type<tc>, window_params = [{transform_indices = @transform_0, window_bounds = array<i64: 32, 64>}, {pipeline_mode = #tpu.pipeline_mode<synchronous>, transform_indices = @transform_1, window_bounds = array<i64: 64, 128>}, {pipeline_mode = #tpu.pipeline_mode<synchronous>, transform_indices = @transform_2, window_bounds = array<i64: 1, 128>}, {transform_indices = @transform_3, window_bounds = array<i64: 32, 128>}]} {
    %c0 = arith.constant 0 : index
    %c0_0 = arith.constant 0 : index
    %0 = vector.load %arg1[%c0, %c0_0] : memref<32x64xf32, #tpu.memory_space<vmem>>, vector<32x64xf32>
    %c0_1 = arith.constant 0 : index
    %c0_2 = arith.constant 0 : index
    %1 = vector.load %arg2[%c0_1, %c0_2] : memref<64x128xf32, #tpu.memory_space<vmem>>, vector<64x128xf32>
    %cst = arith.constant dense<0.000000e+00> : vector<32x128xf32>
    %2 = tpu.matmul %0, %1, %cst {dimension_numbers = #tpu.dot_dimension_numbers<[1], [0], [0], [1], [0, 0, 1, 1], [], []>} : vector<32x64xf32>, vector<64x128xf32>, vector<32x128xf32> -> vector<32x128xf32>
    %c0_3 = arith.constant 0 : index
    %c0_4 = arith.constant 0 : index
    %3 = vector.load %arg3[%c0_3, %c0_4] : memref<1x128xf32, #tpu.memory_space<vmem>>, vector<1x128xf32>
    %4 = vector.broadcast %3 : vector<1x128xf32> to vector<32x128xf32>
    %5 = arith.addf %2, %4 : vector<32x128xf32>
    %c0_5 = arith.constant 0 : index
    %c0_6 = arith.constant 0 : index
    %6 = vector.load %arg4[%c0_5, %c0_6] : memref<32x128xf32, #tpu.memory_space<vmem>>, vector<32x128xf32>
    tpu.vector_store %arg4[%c0_5, %c0_6], %5 {strides = array<i32>} : memref<32x128xf32, #tpu.memory_space<vmem>>, vector<32x128xf32>,
    return
  }
  func.func @transform_0(%arg0: i32) -> (i32, i32) {
    %c0_i32 = arith.constant 0 : i32
    %c0_i32_0 = arith.constant 0 : i32
    return %arg0, %c0_i32 : i32, i32
  }
  func.func @transform_1(%arg0: i32) -> (i32, i32) {
    %c0_i32 = arith.constant 0 : i32
    %c0_i32_0 = arith.constant 0 : i32
    %c0_i32_1 = arith.constant 0 : i32
    return %c0_i32, %c0_i32_0 : i32, i32
  }
  func.func @transform_2(%arg0: i32) -> (i32, i32) {
    %c0_i32 = arith.constant 0 : i32
    %c0_i32_0 = arith.constant 0 : i32
    %c0_i32_1 = arith.constant 0 : i32
    return %c0_i32, %c0_i32_0 : i32, i32
  }
  func.func @transform_3(%arg0: i32) -> (i32, i32) {
    %c0_i32 = arith.constant 0 : i32
    %c0_i32_0 = arith.constant 0 : i32
    return %arg0, %c0_i32 : i32, i32
  }
}

</mosaic_0001>

<llo_original>
// kernel: tpu_custom_call.1
$region0: #{tpu_custom_call.1}
  #allocation0 [shape = 'u32[]', space=smem, size = 0x4, offset = 0x4, fixed_abs, tag = 'smem constant byte address 0x4 - core index']
  #allocation1 [shape = 'u32[144,128]{1,0:T(1,128)}', space=vmem, size = 0x12000, scoped, tag = 'internal scratch']
  %s0 = inlined_call_operand.hbm [shape: f32[32,64], index: 0, kind: input, shape index: {}]
  %s1 = inlined_call_operand.hbm [shape: f32[64,128], index: 1, kind: input, shape index: {}]
  %s2 = inlined_call_operand.vmem [shape: f32[1,128], index: 2, kind: input, shape index: {}]
  %s3 = inlined_call_operand.hbm [shape: f32[32,128], index: 3, kind: output, shape index: {}]
  %s4 = sld [smem:[#allocation0]]
  $region30: #{tpu_custom_call.1} parent=0
    _
  %s6 = ssub.s32 1, %s4
  %s7 = scalar_select 0, %s6, %s4
  $region1: #{tpu_custom_call.1} parent=0
    #allocation2 [shape = 'u8[16384]{0}', space=vmem, size = 0x4000, scoped, tag = 'input window, operand 0, single buffered']
    #allocation3 [shape = 's32[1]{0}', space=sflag, size = 0x4, scoped, tag = 'scoped memory for tpu_custom_call.1']
    #allocation4 [shape = 's32[1]{0}', space=sflag, size = 0x4, scoped, tag = 'scoped memory for tpu_custom_call.1']
    #allocation5 [shape = 'u8[32768]{0}', space=vmem, size = 0x8000, scoped, tag = 'input window, operand 1, single buffered']
    #allocation6 [shape = 's32[1]{0}', space=sflag, size = 0x4, scoped, tag = 'scoped memory for tpu_custom_call.1']
    #allocation7 [shape = 'u8[16384]{0}', space=vmem, size = 0x4000, scoped, tag = 'output window, operand 0, single buffered']
    %8 = vsyncpa [#allocation3], 0
    %9 = vsyncpa [#allocation6], 0
    %10 = vsyncpa [#allocation4], 0
    // Predicated region
    $region2: #{tpu_custom_call.1} parent=1 // pred_check
      _
    $region3: #{tpu_custom_call.1} parent=1 // pred_check_branch
      %12 = sbr.rel (0) target = $region5
    $region4: #{tpu_custom_call.1} parent=1 // pred_region
      %s14 = ssub.s32 512, 512
      %15 = vsyncadd [#allocation3], %s14
      %s16 = sshll.u32 [#allocation2], 4
      %s17 = int_to_ptr.vmem [resolvable:$true] %s16
      %22 = dma.hbm_to_vmem [thread:$0]  %s0, 512, %s17, [#allocation3], 128, 128, 8
    $region5: #{tpu_custom_call.1} parent=1 // pred_fallthru
      _
    // Predicated region
    $region6: #{tpu_custom_call.1} parent=1 // pred_check
      _
    $region7: #{tpu_custom_call.1} parent=1 // pred_check_branch
      %24 = sbr.rel (0) target = $region9
    $region8: #{tpu_custom_call.1} parent=1 // pred_region
      %s26 = ssub.s32 1024, 1024
      %27 = vsyncadd [#allocation6], %s26
      %s28 = sshll.u32 [#allocation5], 4
      %s29 = int_to_ptr.vmem [resolvable:$true] %s28
      %34 = dma.hbm_to_vmem [thread:$0]  %s1, 1024, %s29, [#allocation6], 128, 128, 8
    $region9: #{tpu_custom_call.1} parent=1 // pred_fallthru
      _
    // Predicated region
    $region10: #{tpu_custom_call.1} parent=1 // pred_check
      _
    $region11: #{tpu_custom_call.1} parent=1 // pred_check_branch
      %36 = sbr.rel (0) target = $region13
    $region12: #{tpu_custom_call.1} parent=1 // pred_region
      _
    $region13: #{tpu_custom_call.1} parent=1 // pred_fallthru
      _
    // Predicated region
    $region14: #{tpu_custom_call.1} parent=1 // pred_check
      _
    $region15: #{tpu_custom_call.1} parent=1 // pred_check_branch
      %38 = sbr.rel (0) target = $region17
    $region16: #{tpu_custom_call.1} parent=1 // pred_region
      %39 = dma.done [#allocation3], 512
    $region17: #{tpu_custom_call.1} parent=1 // pred_fallthru
      _
    // Predicated region
    $region18: #{tpu_custom_call.1} parent=1 // pred_check
      _
    $region19: #{tpu_custom_call.1} parent=1 // pred_check_branch
      %41 = sbr.rel (0) target = $region21
    $region20: #{tpu_custom_call.1} parent=1 // pred_region
      %42 = dma.done [#allocation6], 1024
    $region21: #{tpu_custom_call.1} parent=1 // pred_fallthru
      _
    %v43 = vld [vmem:[#allocation2] sm:$0xff]
    %v44 = vld [vmem:[#allocation2 + $0x8] sm:$0xff]
    %v45 = vld [vmem:[#allocation2 + $0x10] sm:$0xff]
    %v46 = vld [vmem:[#allocation2 + $0x18] sm:$0xff]
    %v47 = vld [vmem:[#allocation5] sm:$0xff]
    %v48 = vld [vmem:[#allocation5 + $0x8] sm:$0xff]
    %v49 = vld [vmem:[#allocation5 + $0x10] sm:$0xff]
    %v50 = vld [vmem:[#allocation5 + $0x18] sm:$0xff]
    %v51 = vld [vmem:[#allocation5 + $0x20] sm:$0xff]
    %v52 = vld [vmem:[#allocation5 + $0x28] sm:$0xff]
    %v53 = vld [vmem:[#allocation5 + $0x30] sm:$0xff]
    %v54 = vld [vmem:[#allocation5 + $0x38] sm:$0xff]
    %v55 = vld [vmem:[%s2] sm:$0x1]
    %v57 = vlaneseq
    %v58 = vshrl.u32 %v57, 7
    %v59 = vsub.s32 0, %v58
    %v60 = vrot.slane %v55, %v59
    %vm62 = vcmask 523264
    %v64 = vsel %vm62, %v43, 0
    %v67 = vsel %vm62, %v44, 0
    %v70 = vsel %vm62, %v45, 0
    %v73 = vsel %vm62, %v46, 0
    %75 = vmatprep.subr.mxu0 0.0
    %76 = vmatpush1.msra.mxu0 0.0
    %77 = vmatprep.subr.mxu0 0.0
    %78 = vmatpush1.msra.mxu0 0.0
    %79 = vmatprep.subr.mxu0 0.0
    %80 = vmatpush1.msra.mxu0 0.0
    %81 = vmatprep.subr.mxu0 0.0
    %82 = vmatpush1.msra.mxu0 0.0
    %83 = vmatprep.subr.mxu0 0.0
    %84 = vmatpush1.msra.mxu0 0.0
    %85 = vmatprep.subr.mxu0 0.0
    %86 = vmatpush1.msra.mxu0 0.0
    %87 = vmatprep.subr.mxu0 0.0
    %88 = vmatpush1.msra.mxu0 0.0
    %89 = vmatprep.subr.mxu0 0.0
    %90 = vmatpush1.msra.mxu0 0.0
    %91 = vmatprep.subr.mxu0 0.0
    %92 = vmatpush1.msra.mxu0 %v54
    %93 = vmatprep.subr.mxu0 0.0
    %94 = vmatpush1.msra.mxu0 %v53
    %95 = vmatprep.subr.mxu0 0.0
    %96 = vmatpush1.msra.mxu0 %v52
    %97 = vmatprep.subr.mxu0 0.0
    %98 = vmatpush1.msra.mxu0 %v51
    %99 = vmatprep.subr.mxu0 0.0
    %100 = vmatpush1.msra.mxu0 %v50
    %101 = vmatprep.subr.mxu0 0.0
    %102 = vmatpush1.msra.mxu0 %v49
    %103 = vmatprep.subr.mxu0 0.0
    %104 = vmatpush1.msra.mxu0 %v48
    %105 = vmatprep.subr.mxu0 0.0
    %106 = vmatpush1.msra.mxu0 %v47
    %107 = vmatprep.subr.mxu0 0.0
    %108 = vmatpush2.msra.mxu0 0.0
    %109 = vmatprep.subr.mxu0 0.0
    %110 = vmatpush2.msra.mxu0 0.0
    %111 = vmatprep.subr.mxu0 0.0
    %112 = vmatpush2.msra.mxu0 0.0
    %113 = vmatprep.subr.mxu0 0.0
    %114 = vmatpush2.msra.mxu0 0.0
    %115 = vmatprep.subr.mxu0 0.0
    %116 = vmatpush2.msra.mxu0 0.0
    %117 = vmatprep.subr.mxu0 0.0
    %118 = vmatpush2.msra.mxu0 0.0
    %119 = vmatprep.subr.mxu0 0.0
    %120 = vmatpush2.msra.mxu0 0.0
    %121 = vmatprep.subr.mxu0 0.0
    %122 = vmatpush2.msra.mxu0 0.0
    %123 = vmatprep.subr.mxu0 0.0
    %124 = vmatpush2.msra.mxu0 0.0
    %125 = vmatprep.subr.mxu0 0.0
    %126 = vmatpush2.msra.mxu0 0.0
    %127 = vmatprep.subr.mxu0 0.0
    %128 = vmatpush2.msra.mxu0 0.0
    %129 = vmatprep.subr.mxu0 0.0
    %130 = vmatpush2.msra.mxu0 0.0
    %131 = vmatprep.subr.mxu0 0.0
    %132 = vmatpush2.msra.mxu0 0.0
    %133 = vmatprep.subr.mxu0 0.0
    %134 = vmatpush2.msra.mxu0 0.0
    %135 = vmatprep.subr.mxu0 0.0
    %136 = vmatpush2.msra.mxu0 0.0
    %137 = vmatprep.subr.mxu0 0.0
    %138 = vmatpush2.msra.mxu0 0.0
    %139 = vmatprep.mubr.f32.mxu0 0.0
    %140 = vmatmul.mubr.f32.gmra.mxu0 %v64
    %v141 = vpop.f32.mrf.mxu0
    %v142 = vadd.f32 %v60, %v141
    %v143 = vpop.f32.mrf.mxu0
    %144 = vmatprep.mubr.f32.mxu0 0.0
    %145 = vmatmul.mubr.f32.gmra.mxu0 %v67
    %v146 = vpop.f32.mrf.mxu0
    %v147 = vadd.f32 %v60, %v146
    %v148 = vpop.f32.mrf.mxu0
    %149 = vmatprep.mubr.f32.mxu0 0.0
    %150 = vmatmul.mubr.f32.gmra.mxu0 %v70
    %v151 = vpop.f32.mrf.mxu0
    %v152 = vadd.f32 %v60, %v151
    %v153 = vpop.f32.mrf.mxu0
    %154 = vmatprep.mubr.f32.mxu0 0.0
    %155 = vmatmul.mubr.f32.gmra.mxu0 %v73
    %v156 = vpop.f32.mrf.mxu0
    %v157 = vadd.f32 %v60, %v156
    %v158 = vpop.f32.mrf.mxu0
    %159 = vdwg.mxu0
    %160 = vst [vmem:[#allocation7] sm:$0xff] %v142
    %161 = vst [vmem:[#allocation7 + $0x8] sm:$0xff] %v147
    %162 = vst [vmem:[#allocation7 + $0x10] sm:$0xff] %v152
    %163 = vst [vmem:[#allocation7 + $0x18] sm:$0xff] %v157
    // Predicated region
    $region22: #{tpu_custom_call.1} parent=1 // pred_check
      _
    $region23: #{tpu_custom_call.1} parent=1 // pred_check_branch
      %165 = sbr.rel (0) target = $region25
    $region24: #{tpu_custom_call.1} parent=1 // pred_region
      %s167 = ssub.s32 512, 512
      %168 = vsyncadd [#allocation4], %s167
      %s169 = sshll.u32 [#allocation7], 4
      %s170 = int_to_ptr.vmem [resolvable:$true] %s169
      %175 = dma.vmem_to_hbm [thread:$0]  %s170, 512, %s3, [#allocation4], 128, 128, 8
    $region25: #{tpu_custom_call.1} parent=1 // pred_fallthru
      _
    // Predicated region
    $region26: #{tpu_custom_call.1} parent=1 // pred_check
      _
    $region27: #{tpu_custom_call.1} parent=1 // pred_check_branch
      %177 = sbr.rel (0) target = $region29
    $region28: #{tpu_custom_call.1} parent=1 // pred_region
      %178 = dma.done [#allocation4], 512
    $region29: #{tpu_custom_call.1} parent=1 // pred_fallthru
      _
    %179 = vsyncpa [#allocation3], 1
    %180 = vsyncpa [#allocation6], 1
    %181 = vsyncpa [#allocation4], 1

</llo_original>
